<compile_context>
chip_gen: v7x
topology: tpu7x:2x2x1
jax: 0.10.0
libtpu: 0.0.40
codegen_flags: <defaults>
</compile_context>

<pallas_src>
import functools

import jax
import jax.numpy as jnp
from jax.experimental import pallas as pl
from jax.experimental.pallas import tpu as pltpu

EPS = 1e-5          # nn.BatchNorm2d default eps
NEG_SLOPE = 0.01    # nn.LeakyReLU default negative_slope
LANE = 128
VMEM_LIMIT = 32 * 1024 * 1024


# ----------------------------- small helpers ------------------------------ #

def _rup(c, m=LANE):
    return ((c + m - 1) // m) * m


def _pad_last(a, target):
    pad = target - a.shape[-1]
    if pad == 0:
        return a
    return jnp.pad(a, [(0, 0)] * (a.ndim - 1) + [(0, pad)])


def _pad2(w, rows, cols):
    return jnp.pad(w, ((0, rows - w.shape[0]), (0, cols - w.shape[1])))


def _pick_tile(n, candidates):
    for c in candidates:
        if c <= n and n % c == 0:
            return c
    return n


def _leaky(x):
    return jnp.where(x >= 0, x, NEG_SLOPE * x)


def _stats(y):
    """Per-channel [sum; sum of squares] of a (rows, C) tile -> (2, C)."""
    return jnp.concatenate([jnp.sum(y, axis=0, keepdims=True),
                            jnp.sum(y * y, axis=0, keepdims=True)], axis=0)


def _bn_scale_shift(partial_stats, count, gamma_pad, beta_pad):
    """Fold BN (training-mode, biased variance) into y = x*scale + shift."""
    s = partial_stats.reshape(-1, 2, partial_stats.shape[-1]).sum(axis=0)
    mean = s[0] / count
    var = jnp.maximum(s[1] / count - mean * mean, 0.0)   # E[x^2] - mu^2
    scale = gamma_pad * jax.lax.rsqrt(var + EPS)
    shift = beta_pad - mean * scale
    return scale.reshape(1, -1), shift.reshape(1, -1)


# ------------------------------- kernels ----------------------------------- #

def _conv1x1_dual_kernel(x_ref, w_ref, y1_ref, y2_ref, st1_ref, st2_ref, *, c1):
    """Two 1x1 convs (conv1 + skip_conv) sharing the same input, fused into a
    single matmul per tile; writes both raw outputs + per-tile BN stats."""
    x = x_ref[...]
    y = jnp.dot(x, w_ref[...], preferred_element_type=jnp.float32)
    y1 = y[:, :c1]          # lane-aligned split (c1 is a multiple of 128)
    y2 = y[:, c1:]
    y1_ref[...] = y1.astype(y1_ref.dtype)
    y2_ref[...] = y2.astype(y2_ref.dtype)
    st1_ref[...] = _stats(y1)[None]     # (1, 2, c1)
    st2_ref[...] = _stats(y2)[None]     # (1, 2, c2)


def _conv1x1_kernel(x_ref, w_ref, s_ref, h_ref, y_ref, st_ref, *, pre_act):
    """1x1 conv as matmul; optional fused (prev-BN scale/shift + LeakyReLU) on
    the input; writes raw conv output + per-tile BN partial stats."""
    x = x_ref[...]
    if pre_act:
        x = _leaky(x * s_ref[...] + h_ref[...])
    y = jnp.dot(x, w_ref[...], preferred_element_type=jnp.float32)
    y_ref[...] = y.astype(y_ref.dtype)
    st_ref[...] = _stats(y)[None]       # (1, 2, Cout)


def _conv3x3_kernel(xp_ref, w_ref, y_ref, st_ref, *, th):
    """3x3 'same' conv over one batch image, TH output rows per grid step.
    Single im2col matmul per tile + per-tile BN partial stats."""
    h = pl.program_id(1)
    _, Hp, Wp, C = xp_ref.shape
    W = Wp - 2
    Cout = y_ref.shape[-1]

    start = pl.multiple_of(h * th, th)
    x = xp_ref[0, pl.ds(start, th + 2), :, :]        # (TH+2, Wp, C) with halo

    taps = []
    for kh in range(3):
        for kw in range(3):
            taps.append(x[kh:kh + th, kw:kw + W, :])
    patch = jnp.concatenate(taps, axis=-1).reshape(th * W, 9 * C)

    y = jnp.dot(patch, w_ref[...], preferred_element_type=jnp.float32)
    y_ref[...] = y.reshape(1, th, W, Cout).astype(y_ref.dtype)
    st_ref[...] = _stats(y).reshape(1, 1, 2, Cout)


def _bn_act_kernel(x_ref, s_ref, h_ref, o_ref):
    y = x_ref[...] * s_ref[...] + h_ref[...]
    o_ref[...] = _leaky(y).astype(o_ref.dtype)


def _residual_kernel(a_ref, sa_ref, ha_ref, c_ref, sc_ref, hc_ref, o_ref):
    # out = act( act(BN3(y3)) + BN_skip(y_skip) )
    branch = _leaky(a_ref[...] * sa_ref[...] + ha_ref[...])
    y = branch + c_ref[...] * sc_ref[...] + hc_ref[...]
    o_ref[...] = _leaky(y).astype(o_ref.dtype)


# ---------------------------- pallas_call glue ------------------------------ #

def _conv1x1_dual(x2d, w_cat, c1, c2):
    M, Cin = x2d.shape
    tm = _pick_tile(M, (256, 128, 64, 32, 16, 8))
    grid = (M // tm,)
    ctot = c1 + c2

    flops = 2 * M * Cin * ctot
    bytes_acc = 4 * (M * Cin + Cin * ctot + M * ctot + grid[0] * 2 * ctot)

    return pl.pallas_call(
        functools.partial(_conv1x1_dual_kernel, c1=c1),
        out_shape=(jax.ShapeDtypeStruct((M, c1), jnp.float32),
                   jax.ShapeDtypeStruct((M, c2), jnp.float32),
                   jax.ShapeDtypeStruct((grid[0], 2, c1), jnp.float32),
                   jax.ShapeDtypeStruct((grid[0], 2, c2), jnp.float32)),
        grid_spec=pltpu.PrefetchScalarGridSpec(
            num_scalar_prefetch=0, grid=grid,
            in_specs=[pl.BlockSpec((tm, Cin), lambda i: (i, 0)),
                      pl.BlockSpec((Cin, ctot), lambda i: (0, 0))],
            out_specs=[pl.BlockSpec((tm, c1), lambda i: (i, 0)),
                       pl.BlockSpec((tm, c2), lambda i: (i, 0)),
                       pl.BlockSpec((1, 2, c1), lambda i: (i, 0, 0)),
                       pl.BlockSpec((1, 2, c2), lambda i: (i, 0, 0))],
        ),
        compiler_params=pltpu.CompilerParams(
            dimension_semantics=("parallel",),
            vmem_limit_bytes=VMEM_LIMIT),
        cost_estimate=pl.CostEstimate(flops=flops, transcendentals=0,
                                      bytes_accessed=bytes_acc),
    )(x2d, w_cat)


def _conv1x1(x2d, w, scale_in=None, shift_in=None):
    M, Cin = x2d.shape
    Cout = w.shape[1]
    tm = _pick_tile(M, (256, 128, 64, 32, 16, 8))
    grid = (M // tm,)
    pre_act = scale_in is not None
    if not pre_act:
        scale_in = jnp.ones((1, Cin), jnp.float32)
        shift_in = jnp.zeros((1, Cin), jnp.float32)

    flops = 2 * M * Cin * Cout
    bytes_acc = 4 * (M * Cin + Cin * Cout + M * Cout + grid[0] * 2 * Cout)

    return pl.pallas_call(
        functools.partial(_conv1x1_kernel, pre_act=pre_act),
        out_shape=(jax.ShapeDtypeStruct((M, Cout), jnp.float32),
                   jax.ShapeDtypeStruct((grid[0], 2, Cout), jnp.float32)),
        grid_spec=pltpu.PrefetchScalarGridSpec(
            num_scalar_prefetch=0, grid=grid,
            in_specs=[pl.BlockSpec((tm, Cin), lambda i: (i, 0)),
                      pl.BlockSpec((Cin, Cout), lambda i: (0, 0)),
                      pl.BlockSpec((1, Cin), lambda i: (0, 0)),
                      pl.BlockSpec((1, Cin), lambda i: (0, 0))],
            out_specs=[pl.BlockSpec((tm, Cout), lambda i: (i, 0)),
                       pl.BlockSpec((1, 2, Cout), lambda i: (i, 0, 0))],
        ),
        compiler_params=pltpu.CompilerParams(
            dimension_semantics=("parallel",),
            vmem_limit_bytes=VMEM_LIMIT),
        cost_estimate=pl.CostEstimate(flops=flops, transcendentals=0,
                                      bytes_accessed=bytes_acc),
    )(x2d, w, scale_in, shift_in)


def _conv3x3(x_nhwc, w_packed):
    N, H, W, C = x_nhwc.shape
    Cout = w_packed.shape[1]
    # TODO(synk): halo could be done via in-kernel edge masking instead of this
    # (cheap, (H+2)(W+2)/(HW)) zero pad of the intermediate activation.
    xp = jnp.pad(x_nhwc, ((0, 0), (1, 1), (1, 1), (0, 0)))
    Hp, Wp = H + 2, W + 2
    th = _pick_tile(H, (16, 8, 4, 2, 1))
    grid = (N, H // th)

    flops = 2 * N * H * W * 9 * C * Cout
    bytes_acc = 4 * (N * Hp * Wp * C + 9 * C * Cout + N * H * W * Cout)

    return pl.pallas_call(
        functools.partial(_conv3x3_kernel, th=th),
        out_shape=(jax.ShapeDtypeStruct((N, H, W, Cout), jnp.float32),
                   jax.ShapeDtypeStruct((N, H // th, 2, Cout), jnp.float32)),
        grid_spec=pltpu.PrefetchScalarGridSpec(
            num_scalar_prefetch=0, grid=grid,
            in_specs=[pl.BlockSpec((1, Hp, Wp, C), lambda n, h: (n, 0, 0, 0)),
                      pl.BlockSpec((9 * C, Cout), lambda n, h: (0, 0))],
            out_specs=[pl.BlockSpec((1, th, W, Cout), lambda n, h: (n, h, 0, 0)),
                       pl.BlockSpec((1, 1, 2, Cout), lambda n, h: (n, h, 0, 0))],
        ),
        compiler_params=pltpu.CompilerParams(
            dimension_semantics=("parallel", "arbitrary"),
            vmem_limit_bytes=VMEM_LIMIT),
        cost_estimate=pl.CostEstimate(flops=flops, transcendentals=0,
                                      bytes_accessed=bytes_acc),
    )(xp, w_packed)


def _bn_act(x2d, scale, shift):
    M, C = x2d.shape
    tm = _pick_tile(M, (512, 256, 128, 64, 32, 16, 8))
    grid = (M // tm,)
    return pl.pallas_call(
        _bn_act_kernel,
        out_shape=jax.ShapeDtypeStruct((M, C), jnp.float32),
        grid_spec=pltpu.PrefetchScalarGridSpec(
            num_scalar_prefetch=0, grid=grid,
            in_specs=[pl.BlockSpec((tm, C), lambda i: (i, 0)),
                      pl.BlockSpec((1, C), lambda i: (0, 0)),
                      pl.BlockSpec((1, C), lambda i: (0, 0))],
            out_specs=pl.BlockSpec((tm, C), lambda i: (i, 0)),
        ),
        compiler_params=pltpu.CompilerParams(
            dimension_semantics=("parallel",),
            vmem_limit_bytes=VMEM_LIMIT),
    )(x2d, scale, shift)


def _residual(a, sa, ha, c, sc, hc):
    M, C = a.shape
    tm = _pick_tile(M, (512, 256, 128, 64, 32, 16, 8))
    grid = (M // tm,)
    return pl.pallas_call(
        _residual_kernel,
        out_shape=jax.ShapeDtypeStruct((M, C), jnp.float32),
        grid_spec=pltpu.PrefetchScalarGridSpec(
            num_scalar_prefetch=0, grid=grid,
            in_specs=[pl.BlockSpec((tm, C), lambda i: (i, 0)),
                      pl.BlockSpec((1, C), lambda i: (0, 0)),
                      pl.BlockSpec((1, C), lambda i: (0, 0)),
                      pl.BlockSpec((tm, C), lambda i: (i, 0)),
                      pl.BlockSpec((1, C), lambda i: (0, 0)),
                      pl.BlockSpec((1, C), lambda i: (0, 0))],
            out_specs=pl.BlockSpec((tm, C), lambda i: (i, 0)),
        ),
        compiler_params=pltpu.CompilerParams(
            dimension_semantics=("parallel",),
            vmem_limit_bytes=VMEM_LIMIT),
    )(a, sa, ha, c, sc, hc)


# ------------------------------ module forward ------------------------------ #

def residual_module(x_nchw, p):
    """Forward of ResidualModule (defaults: final_batchnorm=False, LeakyReLU).

    x_nchw: (N, Cin, H, W)
    p: dict with conv weights w1 (Cmid,Cin,1,1), w2 (Cmid,Cmid,3,3),
       w3 (Cout,Cmid,1,1), wsk (Cout,Cin,1,1) and BN affine params
       g1,b1,g2,b2,g3,b3,gsk,bsk.  (Conv biases are omitted: they cancel
       exactly under training-mode BatchNorm.)
    Returns (N, Cout, H, W).
    """
    N, Cin, H, W = x_nchw.shape
    Cmid = p['w2'].shape[0]
    Cout = p['w3'].shape[0]
    Cin_p, Cmid_p, Cout_p = _rup(Cin), _rup(Cmid), _rup(Cout)
    M = N * H * W

    # NCHW -> lane-dense (M, Cin_p)
    x = jnp.transpose(x_nchw, (0, 2, 3, 1)).astype(jnp.float32)
    x2d = _pad_last(x.reshape(M, Cin), Cin_p)

    # Repack / zero-pad weights to lane-aligned matmul operands.
    w1 = _pad2(jnp.transpose(p['w1'][:, :, 0, 0], (1, 0)), Cin_p, Cmid_p)
    wsk = _pad2(jnp.transpose(p['wsk'][:, :, 0, 0], (1, 0)), Cin_p, Cout_p)
    w3 = _pad2(jnp.transpose(p['w3'][:, :, 0, 0], (1, 0)), Cmid_p, Cout_p)
    w2 = jnp.transpose(p['w2'], (2, 3, 1, 0))                     # (3,3,Cmid,Cmid)
    w2 = jnp.pad(w2, ((0, 0), (0, 0),
                      (0, Cmid_p - Cmid), (0, Cmid_p - Cmid)))
    w2 = w2.reshape(9 * Cmid_p, Cmid_p)                           # im2col packing

    g1, b1 = _pad_last(p['g1'], Cmid_p), _pad_last(p['b1'], Cmid_p)
    g2, b2 = _pad_last(p['g2'], Cmid_p), _pad_last(p['b2'], Cmid_p)
    g3, b3 = _pad_last(p['g3'], Cout_p), _pad_last(p['b3'], Cout_p)
    gsk, bsk = _pad_last(p['gsk'], Cout_p), _pad_last(p['bsk'], Cout_p)

    # conv1 + skip conv share x -> single fused matmul per tile.
    w_cat = jnp.concatenate([w1, wsk], axis=1)        # (Cin_p, Cmid_p + Cout_p)
    y1_raw, ysk_raw, st1, st_sk = _conv1x1_dual(x2d, w_cat, Cmid_p, Cout_p)
    s1, h1 = _bn_scale_shift(st1, M, g1, b1)
    ssk, hsk = _bn_scale_shift(st_sk, M, gsk, bsk)

    # BN1 + act
    a1 = _bn_act(y1_raw, s1, h1)                                   # (M, Cmid_p)

    # conv2 (3x3 'same')
    y2_raw, st2 = _conv3x3(a1.reshape(N, H, W, Cmid_p), w2)
    s2, h2 = _bn_scale_shift(st2, M, g2, b2)

    # conv3 (1x1) with BN2 + act fused onto its input
    y3_raw, st3 = _conv1x1(y2_raw.reshape(M, Cmid_p), w3, s2, h2)
    s3, h3 = _bn_scale_shift(st3, M, g3, b3)

    # out = act( act(BN3(y3)) + BN_skip(ysk) )
    out2d = _residual(y3_raw, s3, h3, ysk_raw, ssk, hsk)           # (M, Cout_p)

    out = out2d[:, :Cout].reshape(N, H, W, Cout)
    return jnp.transpose(out, (0, 3, 1, 2))


# -------------------------------- self-test --------------------------------- #

def _reference(x, p, b1c, b2c, b3c, bskc):
    """Pure-JAX reference matching PyTorch forward in train mode (keeps conv
    biases to verify they cancel under BN)."""
    def leaky(v):
        return jnp.where(v >= 0, v, NEG_SLOPE * v)

    def conv_bn(v, w, bconv, gamma, beta, pad):
        y = jax.lax.conv_general_dilated(
            v, w, (1, 1), [(pad, pad), (pad, pad)],
            dimension_numbers=("NCHW", "OIHW", "NCHW"))
        y = y + bconv[None, :, None, None]
        mu = y.mean(axis=(0, 2, 3), keepdims=True)
        var = ((y - mu) ** 2).mean(axis=(0, 2, 3), keepdims=True)
        return ((y - mu) * jax.lax.rsqrt(var + EPS) * gamma[None, :, None, None]
                + beta[None, :, None, None])

    xs = conv_bn(x, p['wsk'], bskc, p['gsk'], p['bsk'], 0)
    h = leaky(conv_bn(x, p['w1'], b1c, p['g1'], p['b1'], 0))
    h = leaky(conv_bn(h, p['w2'], b2c, p['g2'], p['b2'], 1))
    h = leaky(conv_bn(h, p['w3'], b3c, p['g3'], p['b3'], 0))
    return leaky(h + xs)


if __name__ == "__main__":
    N, Cin, Cout, H, W = 2, 4, 8, 16, 16
    Cmid = 64   # ResidualModule default intermediate_channels

    key = jax.random.PRNGKey(0)
    ks = jax.random.split(key, 9)

    def conv_init(k, cout, cin, kh, kw):
        fan_in = cin * kh * kw
        bound = (1.0 / fan_in) ** 0.5
        kw_, kb_ = jax.random.split(k)
        w = jax.random.uniform(kw_, (cout, cin, kh, kw), jnp.float32, -bound, bound)
        b = jax.random.uniform(kb_, (cout,), jnp.float32, -bound, bound)
        return w, b

    def bn_init(k, c):
        kg, kb = jax.random.split(k)
        return (1.0 + 0.1 * jax.random.normal(kg, (c,), jnp.float32),
                0.1 * jax.random.normal(kb, (c,), jnp.float32))

    w1, b1c = conv_init(ks[0], Cmid, Cin, 1, 1)
    w2, b2c = conv_init(ks[1], Cmid, Cmid, 3, 3)
    w3, b3c = conv_init(ks[2], Cout, Cmid, 1, 1)
    wsk, bskc = conv_init(ks[3], Cout, Cin, 1, 1)
    g1, be1 = bn_init(ks[4], Cmid)
    g2, be2 = bn_init(ks[5], Cmid)
    g3, be3 = bn_init(ks[6], Cout)
    gsk, besk = bn_init(ks[7], Cout)
    x = jax.random.normal(ks[8], (N, Cin, H, W), jnp.float32)

    params = dict(w1=w1, w2=w2, w3=w3, wsk=wsk,
                  g1=g1, b1=be1, g2=g2, b2=be2,
                  g3=g3, b3=be3, gsk=gsk, bsk=besk)

    out = residual_module(x, params)
    out = jax.block_until_ready(out)

    ref = _reference(x, params, b1c, b2c, b3c, bskc)

    assert out.shape == (N, Cout, H, W)
    max_err = jnp.max(jnp.abs(out - ref))
    assert jnp.allclose(out, ref, atol=1e-3, rtol=1e-3), \
        f"mismatch vs reference: max abs err {max_err}"
    print("KERNEL_OK")
</pallas_src>

<mosaic_0001>
module attributes {stable_mosaic.version = 11 : i64} {
  func.func @_conv1x1_dual_kernel(%arg0: i32, %arg1: memref<256x128xf32, #tpu.memory_space<vmem>>, %arg2: memref<128x256xf32, #tpu.memory_space<vmem>>, %arg3: memref<256x128xf32, #tpu.memory_space<vmem>>, %arg4: memref<256x128xf32, #tpu.memory_space<vmem>>, %arg5: memref<1x2x128xf32, #tpu.memory_space<vmem>>, %arg6: memref<1x2x128xf32, #tpu.memory_space<vmem>>) attributes {dimension_semantics = [#tpu.dimension_semantics<parallel>], iteration_bounds = array<i64: 2>, scalar_prefetch = 0 : i64, scratch_operands = 0 : i64, tpu.core_type = #tpu.core_type<tc>, window_params = [{transform_indices = @transform_0, window_bounds = array<i64: 256, 128>}, {pipeline_mode = #tpu.pipeline_mode<synchronous>, transform_indices = @transform_1, window_bounds = array<i64: 128, 256>}, {transform_indices = @transform_2, window_bounds = array<i64: 256, 128>}, {transform_indices = @transform_3, window_bounds = array<i64: 256, 128>}, {transform_indices = @transform_4, window_bounds = array<i64: 1, 2, 128>}, {transform_indices = @transform_5, window_bounds = array<i64: 1, 2, 128>}]} {
    %c0 = arith.constant 0 : index
    %c0_0 = arith.constant 0 : index
    %0 = vector.load %arg1[%c0, %c0_0] : memref<256x128xf32, #tpu.memory_space<vmem>>, vector<256x128xf32>
    %c0_1 = arith.constant 0 : index
    %c0_2 = arith.constant 0 : index
    %1 = vector.load %arg2[%c0_1, %c0_2] : memref<128x256xf32, #tpu.memory_space<vmem>>, vector<128x256xf32>
    %cst = arith.constant dense<0.000000e+00> : vector<256x256xf32>
    %2 = tpu.matmul %0, %1, %cst {dimension_numbers = #tpu.dot_dimension_numbers<[1], [0], [0], [1], [0, 0, 1, 1], [], []>} : vector<256x128xf32>, vector<128x256xf32>, vector<256x256xf32> -> vector<256x256xf32>
    %3 = vector.extract_strided_slice %2 {offsets = [0, 0], sizes = [256, 128], strides = [1, 1]} : vector<256x256xf32> to vector<256x128xf32>
    %4 = vector.extract_strided_slice %2 {offsets = [0, 128], sizes = [256, 128], strides = [1, 1]} : vector<256x256xf32> to vector<256x128xf32>
    %c0_3 = arith.constant 0 : index
    %c0_4 = arith.constant 0 : index
    %5 = vector.load %arg3[%c0_3, %c0_4] : memref<256x128xf32, #tpu.memory_space<vmem>>, vector<256x128xf32>
    tpu.vector_store %arg3[%c0_3, %c0_4], %3 {strides = array<i32>} : memref<256x128xf32, #tpu.memory_space<vmem>>, vector<256x128xf32>,
    %c0_5 = arith.constant 0 : index
    %c0_6 = arith.constant 0 : index
    %6 = vector.load %arg4[%c0_5, %c0_6] : memref<256x128xf32, #tpu.memory_space<vmem>>, vector<256x128xf32>
    tpu.vector_store %arg4[%c0_5, %c0_6], %4 {strides = array<i32>} : memref<256x128xf32, #tpu.memory_space<vmem>>, vector<256x128xf32>,
    %cst_7 = arith.constant dense<0.000000e+00> : vector<128xf32>
    %7 = vector.multi_reduction <add>, %3, %cst_7 [0] : vector<256x128xf32> to vector<128xf32>
    %8 = vector.shape_cast %7 : vector<128xf32> to vector<1x128xf32>
    %9 = arith.mulf %3, %3 : vector<256x128xf32>
    %cst_8 = arith.constant dense<0.000000e+00> : vector<128xf32>
    %10 = vector.multi_reduction <add>, %9, %cst_8 [0] : vector<256x128xf32> to vector<128xf32>
    %11 = vector.shape_cast %10 : vector<128xf32> to vector<1x128xf32>
    %12 = tpu.concatenate %8, %11 in 0 : vector<1x128xf32>, vector<1x128xf32> -> vector<2x128xf32>
    %13 = vector.shape_cast %12 : vector<2x128xf32> to vector<1x2x128xf32>
    %c0_9 = arith.constant 0 : index
    %c0_10 = arith.constant 0 : index
    %c0_11 = arith.constant 0 : index
    %14 = vector.load %arg5[%c0_9, %c0_10, %c0_11] : memref<1x2x128xf32, #tpu.memory_space<vmem>>, vector<1x2x128xf32>
    tpu.vector_store %arg5[%c0_9, %c0_10, %c0_11], %13 {strides = array<i32>} : memref<1x2x128xf32, #tpu.memory_space<vmem>>, vector<1x2x128xf32>,
    %cst_12 = arith.constant dense<0.000000e+00> : vector<128xf32>
    %15 = vector.multi_reduction <add>, %4, %cst_12 [0] : vector<256x128xf32> to vector<128xf32>
    %16 = vector.shape_cast %15 : vector<128xf32> to vector<1x128xf32>
    %17 = arith.mulf %4, %4 : vector<256x128xf32>
    %cst_13 = arith.constant dense<0.000000e+00> : vector<128xf32>
    %18 = vector.multi_reduction <add>, %17, %cst_13 [0] : vector<256x128xf32> to vector<128xf32>
    %19 = vector.shape_cast %18 : vector<128xf32> to vector<1x128xf32>
    %20 = tpu.concatenate %16, %19 in 0 : vector<1x128xf32>, vector<1x128xf32> -> vector<2x128xf32>
    %21 = vector.shape_cast %20 : vector<2x128xf32> to vector<1x2x128xf32>
    %c0_14 = arith.constant 0 : index
    %c0_15 = arith.constant 0 : index
    %c0_16 = arith.constant 0 : index
    %22 = vector.load %arg6[%c0_14, %c0_15, %c0_16] : memref<1x2x128xf32, #tpu.memory_space<vmem>>, vector<1x2x128xf32>
    tpu.vector_store %arg6[%c0_14, %c0_15, %c0_16], %21 {strides = array<i32>} : memref<1x2x128xf32, #tpu.memory_space<vmem>>, vector<1x2x128xf32>,
    return
  }
  func.func @transform_0(%arg0: i32) -> (i32, i32) {
    %c0_i32 = arith.constant 0 : i32
    %c0_i32_0 = arith.constant 0 : i32
    return %arg0, %c0_i32 : i32, i32
  }
  func.func @transform_1(%arg0: i32) -> (i32, i32) {
    %c0_i32 = arith.constant 0 : i32
    %c0_i32_0 = arith.constant 0 : i32
    %c0_i32_1 = arith.constant 0 : i32
    return %c0_i32, %c0_i32_0 : i32, i32
  }
  func.func @transform_2(%arg0: i32) -> (i32, i32) {
    %c0_i32 = arith.constant 0 : i32
    %c0_i32_0 = arith.constant 0 : i32
    return %arg0, %c0_i32 : i32, i32
  }
  func.func @transform_3(%arg0: i32) -> (i32, i32) {
    %c0_i32 = arith.constant 0 : i32
    %c0_i32_0 = arith.constant 0 : i32
    return %arg0, %c0_i32 : i32, i32
  }
  func.func @transform_4(%arg0: i32) -> (i32, i32, i32) {
    %c0_i32 = arith.constant 0 : i32
    %c0_i32_0 = arith.constant 0 : i32
    %c0_i32_1 = arith.constant 0 : i32
    return %arg0, %c0_i32, %c0_i32_0 : i32, i32, i32
  }
  func.func @transform_5(%arg0: i32) -> (i32, i32, i32) {
    %c0_i32 = arith.constant 0 : i32
    %c0_i32_0 = arith.constant 0 : i32
    %c0_i32_1 = arith.constant 0 : i32
    return %arg0, %c0_i32, %c0_i32_0 : i32, i32, i32
  }
}

</mosaic_0001>

<llo_original>
// kernel: tpu_custom_call.1
$region0: #{tpu_custom_call.1}
  #allocation0 [shape = 'u32[]', space=smem, size = 0x4, offset = 0x4, fixed_abs, tag = 'smem constant byte address 0x4 - core index']
  #allocation1 [shape = 'u32[144,128]{1,0:T(1,128)}', space=vmem, size = 0x12000, scoped, tag = 'internal scratch']
  %s0 = inlined_call_operand.hbm [shape: f32[512,128], index: 0, kind: input, shape index: {}]
  %s1 = inlined_call_operand.hbm [shape: f32[128,256], index: 1, kind: input, shape index: {}]
  %s2 = inlined_call_operand.hbm [shape: f32[512,128], index: 2, kind: output, shape index: {0}]
  %s3 = inlined_call_operand.hbm [shape: f32[512,128], index: 3, kind: output, shape index: {1}]
  %s4 = inlined_call_operand.hbm [shape: f32[2,2,128], index: 4, kind: output, shape index: {2}]
  %s5 = inlined_call_operand.hbm [shape: f32[2,2,128], index: 5, kind: output, shape index: {3}]
  %6 = xla_tuple %s2, %s3, %s4, %s5
  %s7 = sld [smem:[#allocation0]]
  $region73: #{tpu_custom_call.1} parent=0
    _
  %s9 = ssub.s32 1, %s7
  %s10 = scalar_select 0, %s9, %s7
  $region1: #{tpu_custom_call.1} parent=0
    #allocation2 [shape = 'u8[262144]{0}', space=vmem, size = 0x40000, scoped, tag = 'input window, operand 0']
    #allocation3 [shape = 's32[2]{0}', space=sflag, size = 0x8, scoped, tag = 'scoped memory for tpu_custom_call.1']
    #allocation4 [shape = 's32[2]{0}', space=sflag, size = 0x8, scoped, tag = 'scoped memory for tpu_custom_call.1']
    #allocation5 [shape = 'u8[131072]{0}', space=vmem, size = 0x20000, scoped, tag = 'input window, operand 1, single buffered']
    #allocation6 [shape = 's32[1]{0}', space=sflag, size = 0x4, scoped, tag = 'scoped memory for tpu_custom_call.1']
    #allocation7 [shape = 'u8[262144]{0}', space=vmem, size = 0x40000, scoped, tag = 'output window, operand 0']
    #allocation8 [shape = 'u8[262144]{0}', space=vmem, size = 0x40000, scoped, tag = 'output window, operand 1']
    #allocation9 [shape = 's32[2]{0}', space=sflag, size = 0x8, scoped, tag = 'scoped memory for tpu_custom_call.1']
    #allocation10 [shape = 'u8[2048]{0}', space=vmem, size = 0x800, scoped, tag = 'output window, operand 2']
    #allocation11 [shape = 'u8[2048]{0}', space=vmem, size = 0x800, scoped, tag = 'output window, operand 3']
    #allocation12 [shape = 's32[2]{0}', space=sflag, size = 0x8, scoped, tag = 'scoped memory for tpu_custom_call.1']
    %11 = vsyncpa [#allocation3], 0
    %s12 = scalar_lea.sflag [#allocation3], 1
    %13 = vsyncpa %s12, 0
    %14 = vsyncpa [#allocation6], 0
    %15 = vsyncpa [#allocation4], 0
    %s16 = scalar_lea.sflag [#allocation4], 1
    %17 = vsyncpa %s16, 0
    %18 = vsyncpa [#allocation9], 0
    %s19 = scalar_lea.sflag [#allocation9], 1
    %20 = vsyncpa %s19, 0
    %21 = vsyncpa [#allocation12], 0
    %s22 = scalar_lea.sflag [#allocation12], 1
    %23 = vsyncpa %s22, 0
    loop: start=0, step=1, limit=4
    $region2: #{tpu_custom_call.1} parent=1 // loop_pre_header
      _
    $region3: #{tpu_custom_call.1} parent=1 // loop_header
      %s25 = sphi 0, %s29
      %p26 = scmp.ge.s32.totalorder %s25, 4
      %s35 = sphi 0, %s37
      %s38 = sphi 0, %s35
      %s39 = sphi 0, %s38
      %s55 = sphi 0, %s39
      %s59 = sphi 0, %s59
      %s61 = sphi 0, %s59
      %s62 = sphi 0, %s61
      %s76 = sphi 0, %s62
      %s82 = sphi 0, %s84
      %s85 = sphi 0, %s82
      %s86 = sphi 0, %s85
      %s102 = sphi 0, %s86
      %s108 = sphi 0, %s110
      %s111 = sphi 0, %s108
      %s112 = sphi 0, %s111
      %s128 = sphi 0, %s112
      %s134 = sphi 0, %s136
      %s137 = sphi 0, %s134
      %s138 = sphi 0, %s137
      %s154 = sphi 0, %s138
      %s160 = sphi 0, %s162
      %s163 = sphi 0, %s160
      %s164 = sphi 0, %s163
      %s180 = sphi 0, %s164
    $region4: #{tpu_custom_call.1} parent=1 // loop_header_branch
      %28 = sbr.rel (%p26) target = $region8
    $region5: #{tpu_custom_call.1} parent=1 // loop_body
      %s30 = ssub.s32 %s25, 1
      %s31 = ssub.s32 %s25, 2
      %s32 = sadd.s32 %s25, 1
      %s33 = ssub.s32 %s25, %s32
      %p34 = scmp.eq.s32.totalorder %s33, 0
      %s36 = sadd.s32 %s35, 1
      %s37 = scalar_select %p34, %s35, %s36
      %p40 = pneg %p34
      %p41 = scmp.eq.s32.totalorder %s25, 1
      %p42 = por %p40, %p41
      %p43 = scmp.ne.s32.totalorder %s35, %s38
      %p44 = scmp.eq.s32.totalorder %s25, 0
      %p45 = por %p43, %p44
      %p46 = scmp.ne.s32.totalorder %s35, %s38
      %p47 = scmp.eq.s32.totalorder %s30, 1
      %p48 = por %p46, %p47
      %p49 = scmp.ne.s32.totalorder %s38, %s39
      %p50 = scmp.eq.s32.totalorder %s30, 0
      %p51 = por %p49, %p50
      %p52 = scmp.ne.s32.totalorder %s38, %s39
      %p53 = scmp.eq.s32.totalorder %s31, 1
      %p54 = por %p52, %p53
      %p56 = scmp.ne.s32.totalorder %s39, %s55
      %p57 = scmp.eq.s32.totalorder %s31, 0
      %p58 = por %p56, %p57
      %s60 = sadd.s32 %s59, 1
      %p63 = scmp.eq.s32.totalorder %s25, 1
      %p64 = scmp.ne.s32.totalorder %s59, %s61
      %p65 = scmp.eq.s32.totalorder %s25, 0
      %p66 = por %p64, %p65
      %p67 = scmp.ne.s32.totalorder %s59, %s61
      %p68 = scmp.eq.s32.totalorder %s30, 1
      %p69 = por %p67, %p68
      %p70 = scmp.ne.s32.totalorder %s61, %s62
      %p71 = scmp.eq.s32.totalorder %s30, 0
      %p72 = por %p70, %p71
      %p73 = scmp.ne.s32.totalorder %s61, %s62
      %p74 = scmp.eq.s32.totalorder %s31, 1
      %p75 = por %p73, %p74
      %p77 = scmp.ne.s32.totalorder %s62, %s76
      %p78 = scmp.eq.s32.totalorder %s31, 0
      %p79 = por %p77, %p78
      %s80 = ssub.s32 %s25, %s32
      %p81 = scmp.eq.s32.totalorder %s80, 0
      %s83 = sadd.s32 %s82, 1
      %s84 = scalar_select %p81, %s82, %s83
      %p87 = pneg %p81
      %p88 = scmp.eq.s32.totalorder %s25, 1
      %p89 = por %p87, %p88
      %p90 = scmp.ne.s32.totalorder %s82, %s85
      %p91 = scmp.eq.s32.totalorder %s25, 0
      %p92 = por %p90, %p91
      %p93 = scmp.ne.s32.totalorder %s82, %s85
      %p94 = scmp.eq.s32.totalorder %s30, 1
      %p95 = por %p93, %p94
      %p96 = scmp.ne.s32.totalorder %s85, %s86
      %p97 = scmp.eq.s32.totalorder %s30, 0
      %p98 = por %p96, %p97
      %p99 = scmp.ne.s32.totalorder %s85, %s86
      %p100 = scmp.eq.s32.totalorder %s31, 1
      %p101 = por %p99, %p100
      %p103 = scmp.ne.s32.totalorder %s86, %s102
      %p104 = scmp.eq.s32.totalorder %s31, 0
      %p105 = por %p103, %p104
      %s106 = ssub.s32 %s25, %s32
      %p107 = scmp.eq.s32.totalorder %s106, 0
      %s109 = sadd.s32 %s108, 1
      %s110 = scalar_select %p107, %s108, %s109
      %p113 = pneg %p107
      %p114 = scmp.eq.s32.totalorder %s25, 1
      %p115 = por %p113, %p114
      %p116 = scmp.ne.s32.totalorder %s108, %s111
      %p117 = scmp.eq.s32.totalorder %s25, 0
      %p118 = por %p116, %p117
      %p119 = scmp.ne.s32.totalorder %s108, %s111
      %p120 = scmp.eq.s32.totalorder %s30, 1
      %p121 = por %p119, %p120
      %p122 = scmp.ne.s32.totalorder %s111, %s112
      %p123 = scmp.eq.s32.totalorder %s30, 0
      %p124 = por %p122, %p123
      %p125 = scmp.ne.s32.totalorder %s111, %s112
      %p126 = scmp.eq.s32.totalorder %s31, 1
      %p127 = por %p125, %p126
      %p129 = scmp.ne.s32.totalorder %s112, %s128
      %p130 = scmp.eq.s32.totalorder %s31, 0
      %p131 = por %p129, %p130
      %s132 = ssub.s32 %s25, %s32
      %p133 = scmp.eq.s32.totalorder %s132, 0
      %s135 = sadd.s32 %s134, 1
      %s136 = scalar_select %p133, %s134, %s135
      %p139 = pneg %p133
      %p140 = scmp.eq.s32.totalorder %s25, 1
      %p141 = por %p139, %p140
      %p142 = scmp.ne.s32.totalorder %s134, %s137
      %p143 = scmp.eq.s32.totalorder %s25, 0
      %p144 = por %p142, %p143
      %p145 = scmp.ne.s32.totalorder %s134, %s137
      %p146 = scmp.eq.s32.totalorder %s30, 1
      %p147 = por %p145, %p146
      %p148 = scmp.ne.s32.totalorder %s137, %s138
      %p149 = scmp.eq.s32.totalorder %s30, 0
      %p150 = por %p148, %p149
      %p151 = scmp.ne.s32.totalorder %s137, %s138
      %p152 = scmp.eq.s32.totalorder %s31, 1
      %p153 = por %p151, %p152
      %p155 = scmp.ne.s32.totalorder %s138, %s154
      %p156 = scmp.eq.s32.totalorder %s31, 0
      %p157 = por %p155, %p156
      %s158 = ssub.s32 %s25, %s32
      %p159 = scmp.eq.s32.totalorder %s158, 0
      %s161 = sadd.s32 %s160, 1
      %s162 = scalar_select %p159, %s160, %s161
      %p165 = pneg %p159
      %p166 = scmp.eq.s32.totalorder %s25, 1
      %p167 = por %p165, %p166
      %p168 = scmp.ne.s32.totalorder %s160, %s163
      %p169 = scmp.eq.s32.totalorder %s25, 0
      %p170 = por %p168, %p169
      %p171 = scmp.ne.s32.totalorder %s160, %s163
      %p172 = scmp.eq.s32.totalorder %s30, 1
      %p173 = por %p171, %p172
      %p174 = scmp.ne.s32.totalorder %s163, %s164
      %p175 = scmp.eq.s32.totalorder %s30, 0
      %p176 = por %p174, %p175
      %p177 = scmp.ne.s32.totalorder %s163, %s164
      %p178 = scmp.eq.s32.totalorder %s31, 1
      %p179 = por %p177, %p178
      %p181 = scmp.ne.s32.totalorder %s164, %s180
      %p182 = scmp.eq.s32.totalorder %s31, 0
      %p183 = por %p181, %p182
      %p184 = scmp.le.s32.totalorder 1, %s25
      %p185 = scmp.lt.s32.totalorder %s25, 3
      %p186 = pnand %p184, %p185
      %p187 = pneg %p186
      // Predicated region
      $region9: #{tpu_custom_call.1} parent=5 // pred_check
        _
      $region10: #{tpu_custom_call.1} parent=5 // pred_check_branch
        %189 = sbr.rel (%p186) target = $region12
      $region11: #{tpu_custom_call.1} parent=5 // pred_region
        %s190 = ssub.s32 %s25, 1
        // Predicated region
        $region13: #{tpu_custom_call.1} parent=11 // pred_check
          %p191 = pneg %p72
        $region14: #{tpu_custom_call.1} parent=11 // pred_check_branch
          %193 = sbr.rel (%p191) target = $region16
        $region15: #{tpu_custom_call.1} parent=11 // pred_region
          %s195 = ssub.s32 4096, 4096
          %196 = vsyncadd [#allocation6], %s195
          %s197 = sshll.u32 [#allocation5], 4
          %s198 = int_to_ptr.vmem [resolvable:$true] %s197
          %203 = dma.hbm_to_vmem [thread:$0]  %s1, 4096, %s198, [#allocation6], 256, 256, 16
        $region16: #{tpu_custom_call.1} parent=11 // pred_fallthru
          _
      $region12: #{tpu_custom_call.1} parent=5 // pred_fallthru
        _
      %p204 = scmp.lt.s32.totalorder %s25, 2
      // Predicated region
      $region17: #{tpu_custom_call.1} parent=5 // pred_check
        %p205 = pneg %p204
      $region18: #{tpu_custom_call.1} parent=5 // pred_check_branch
        %207 = sbr.rel (%p205) target = $region20
      $region19: #{tpu_custom_call.1} parent=5 // pred_region
        // Predicated region
        $region21: #{tpu_custom_call.1} parent=19 // pred_check
          %p208 = pneg %p45
        $region22: #{tpu_custom_call.1} parent=19 // pred_check_branch
          %210 = sbr.rel (%p208) target = $region24
        $region23: #{tpu_custom_call.1} parent=19 // pred_region
          %s211 = sand.u32 %s35, 1
          %s212 = scalar_lea.sflag [#allocation3], %s211
          %s213 = sand.u32 %s35, 1
          %s214 = smul.addr %s213, 256
          %s215 = scalar_lea.vmem [#allocation2], %s214
          %s216 = smul.u32 32, %s25
          %s218 = ssub.s32 4096, 4096
          %219 = vsyncadd %s212, %s218
          %s220 = smul.addr %s216, 128
          %s221 = scalar_lea.hbm %s0, %s220
          %s222 = sshll.u32 %s215, 4
          %s223 = int_to_ptr.vmem [resolvable:$true] %s222
          %228 = dma.hbm_to_vmem [thread:$0]  %s221, 4096, %s223, %s212, 128, 128, 8
        $region24: #{tpu_custom_call.1} parent=19 // pred_fallthru
          _
      $region20: #{tpu_custom_call.1} parent=5 // pred_fallthru
        _
      %p229 = scmp.le.s32.totalorder 1, %s25
      %p230 = scmp.lt.s32.totalorder %s25, 3
      %p231 = pnand %p229, %p230
      %p232 = pneg %p231
      // Predicated region
      $region25: #{tpu_custom_call.1} parent=5 // pred_check
        _
      $region26: #{tpu_custom_call.1} parent=5 // pred_check_branch
        %234 = sbr.rel (%p231) target = $region28
      $region27: #{tpu_custom_call.1} parent=5 // pred_region
        %s235 = ssub.s32 %s25, 1
        %s236 = sand.u32 %s38, 1
        %s237 = scalar_lea.sflag [#allocation3], %s236
        %s238 = sand.u32 %s38, 1
        %s239 = smul.addr %s238, 256
        %s240 = scalar_lea.vmem [#allocation2], %s239
        // Predicated region
        $region29: #{tpu_custom_call.1} parent=27 // pred_check
          %p241 = pneg %p51
        $region30: #{tpu_custom_call.1} parent=27 // pred_check_branch
          %243 = sbr.rel (%p241) target = $region32
        $region31: #{tpu_custom_call.1} parent=27 // pred_region
          %244 = dma.done %s237, 4096
        $region32: #{tpu_custom_call.1} parent=27 // pred_fallthru
          _
        // Predicated region
        $region33: #{tpu_custom_call.1} parent=27 // pred_check
          %p245 = pneg %p72
        $region34: #{tpu_custom_call.1} parent=27 // pred_check_branch
          %247 = sbr.rel (%p245) target = $region36
        $region35: #{tpu_custom_call.1} parent=27 // pred_region
          %248 = dma.done [#allocation6], 4096
        $region36: #{tpu_custom_call.1} parent=27 // pred_fallthru
          _
        %s249 = sand.u32 %s38, 1
        %s250 = scalar_lea.sflag [#allocation3], %s249
        %s251 = sand.u32 %s38, 1
        %s252 = smul.addr %s251, 256
        %s253 = scalar_lea.vmem [#allocation2], %s252
        %p254 = pneg %p51
        %p255 = pneg %p48
        %p256 = pneg %p72
        %p257 = pneg %p69
        %p258 = pneg %p98
        %p259 = pneg %p95
        %s260 = sand.u32 %s85, 1
        %s261 = scalar_lea.sflag [#allocation4], %s260
        %s262 = sand.u32 %s85, 1
        %s263 = smul.addr %s262, 256
        %s264 = scalar_lea.vmem [#allocation7], %s263
        %p265 = pneg %p124
        %p266 = pneg %p121
        %s267 = sand.u32 %s30, 1
        %s268 = scalar_lea.sflag [#allocation9], %s267
        %s269 = sand.u32 %s111, 1
        %s270 = smul.addr %s269, 256
        %s271 = scalar_lea.vmem [#allocation8], %s270
        %p272 = pneg %p150
        %p273 = pneg %p147
        %s274 = sand.u32 %s30, 1
        %s275 = scalar_lea.sflag [#allocation9], %s274
        %s276 = sand.u32 %s137, 1
        %s277 = smul.addr %s276, 2
        %s278 = scalar_lea.vmem [#allocation10], %s277
        %p279 = pneg %p176
        %p280 = pneg %p173
        %s281 = sand.u32 %s163, 1
        %s282 = scalar_lea.sflag [#allocation12], %s281
        %s283 = sand.u32 %s163, 1
        %s284 = smul.addr %s283, 2
        %s285 = scalar_lea.vmem [#allocation11], %s284
        %s286 = smul.u32 32, %s30
        %s287 = smul.u32 32, %s30
        %s288 = smul.u32 32, %s30
        %v289 = vld [vmem:[%s240] sm:$0xff]
        %v290 = vld [vmem:[%s240 + $0x8] sm:$0xff]
        %v291 = vld [vmem:[%s240 + $0x10] sm:$0xff]
        %v292 = vld [vmem:[%s240 + $0x18] sm:$0xff]
        %v293 = vld [vmem:[%s240 + $0x20] sm:$0xff]
        %v294 = vld [vmem:[%s240 + $0x28] sm:$0xff]
        %v295 = vld [vmem:[%s240 + $0x30] sm:$0xff]
        %v296 = vld [vmem:[%s240 + $0x38] sm:$0xff]
        %v297 = vld [vmem:[%s240 + $0x40] sm:$0xff]
        %v298 = vld [vmem:[%s240 + $0x48] sm:$0xff]
        %v299 = vld [vmem:[%s240 + $0x50] sm:$0xff]
        %v300 = vld [vmem:[%s240 + $0x58] sm:$0xff]
        %v301 = vld [vmem:[%s240 + $0x60] sm:$0xff]
        %v302 = vld [vmem:[%s240 + $0x68] sm:$0xff]
        %v303 = vld [vmem:[%s240 + $0x70] sm:$0xff]
        %v304 = vld [vmem:[%s240 + $0x78] sm:$0xff]
        %v305 = vld [vmem:[%s240 + $0x80] sm:$0xff]
        %v306 = vld [vmem:[%s240 + $0x88] sm:$0xff]
        %v307 = vld [vmem:[%s240 + $0x90] sm:$0xff]
        %v308 = vld [vmem:[%s240 + $0x98] sm:$0xff]
        %v309 = vld [vmem:[%s240 + $0xa0] sm:$0xff]
        %v310 = vld [vmem:[%s240 + $0xa8] sm:$0xff]
        %v311 = vld [vmem:[%s240 + $0xb0] sm:$0xff]
        %v312 = vld [vmem:[%s240 + $0xb8] sm:$0xff]
        %v313 = vld [vmem:[%s240 + $0xc0] sm:$0xff]
        %v314 = vld [vmem:[%s240 + $0xc8] sm:$0xff]
        %v315 = vld [vmem:[%s240 + $0xd0] sm:$0xff]
        %v316 = vld [vmem:[%s240 + $0xd8] sm:$0xff]
        %v317 = vld [vmem:[%s240 + $0xe0] sm:$0xff]
        %v318 = vld [vmem:[%s240 + $0xe8] sm:$0xff]
        %v319 = vld [vmem:[%s240 + $0xf0] sm:$0xff]
        %v320 = vld [vmem:[%s240 + $0xf8] sm:$0xff]
        %v321 = vld [vmem:[#allocation5] sm:$0xff]
        %v322 = vld [vmem:[#allocation5 + $0x8] sm:$0xff]
        %v323 = vld [vmem:[#allocation5 + $0x10] sm:$0xff]
        %v324 = vld [vmem:[#allocation5 + $0x18] sm:$0xff]
        %v325 = vld [vmem:[#allocation5 + $0x20] sm:$0xff]
        %v326 = vld [vmem:[#allocation5 + $0x28] sm:$0xff]
        %v327 = vld [vmem:[#allocation5 + $0x30] sm:$0xff]
        %v328 = vld [vmem:[#allocation5 + $0x38] sm:$0xff]
        %v329 = vld [vmem:[#allocation5 + $0x40] sm:$0xff]
        %v330 = vld [vmem:[#allocation5 + $0x48] sm:$0xff]
        %v331 = vld [vmem:[#allocation5 + $0x50] sm:$0xff]
        %v332 = vld [vmem:[#allocation5 + $0x58] sm:$0xff]
        %v333 = vld [vmem:[#allocation5 + $0x60] sm:$0xff]
        %v334 = vld [vmem:[#allocation5 + $0x68] sm:$0xff]
        %v335 = vld [vmem:[#allocation5 + $0x70] sm:$0xff]
        %v336 = vld [vmem:[#allocation5 + $0x78] sm:$0xff]
        %v337 = vld [vmem:[#allocation5 + $0x80] sm:$0xff]
        %v338 = vld [vmem:[#allocation5 + $0x88] sm:$0xff]
        %v339 = vld [vmem:[#allocation5 + $0x90] sm:$0xff]
        %v340 = vld [vmem:[#allocation5 + $0x98] sm:$0xff]
        %v341 = vld [vmem:[#allocation5 + $0xa0] sm:$0xff]
        %v342 = vld [vmem:[#allocation5 + $0xa8] sm:$0xff]
        %v343 = vld [vmem:[#allocation5 + $0xb0] sm:$0xff]
        %v344 = vld [vmem:[#allocation5 + $0xb8] sm:$0xff]
        %v345 = vld [vmem:[#allocation5 + $0xc0] sm:$0xff]
        %v346 = vld [vmem:[#allocation5 + $0xc8] sm:$0xff]
        %v347 = vld [vmem:[#allocation5 + $0xd0] sm:$0xff]
        %v348 = vld [vmem:[#allocation5 + $0xd8] sm:$0xff]
        %v349 = vld [vmem:[#allocation5 + $0xe0] sm:$0xff]
        %v350 = vld [vmem:[#allocation5 + $0xe8] sm:$0xff]
        %v351 = vld [vmem:[#allocation5 + $0xf0] sm:$0xff]
        %v352 = vld [vmem:[#allocation5 + $0xf8] sm:$0xff]
        %353 = vmatprep.subr.mxu0 %v322
        %354 = vmatpush1.msra.mxu0 %v321
        %355 = vmatprep.subr.mxu0 %v324
        %356 = vmatpush1.msra.mxu0 %v323
        %357 = vmatprep.subr.mxu0 %v326
        %358 = vmatpush1.msra.mxu0 %v325
        %359 = vmatprep.subr.mxu0 %v328
        %360 = vmatpush1.msra.mxu0 %v327
        %361 = vmatprep.subr.mxu0 %v330
        %362 = vmatpush1.msra.mxu0 %v329
        %363 = vmatprep.subr.mxu0 %v332
        %364 = vmatpush1.msra.mxu0 %v331
        %365 = vmatprep.subr.mxu0 %v334
        %366 = vmatpush1.msra.mxu0 %v333
        %367 = vmatprep.subr.mxu0 %v336
        %368 = vmatpush1.msra.mxu0 %v335
        %369 = vmatprep.subr.mxu0 %v338
        %370 = vmatpush1.msra.mxu0 %v337
        %371 = vmatprep.subr.mxu0 %v340
        %372 = vmatpush1.msra.mxu0 %v339
        %373 = vmatprep.subr.mxu0 %v342
        %374 = vmatpush1.msra.mxu0 %v341
        %375 = vmatprep.subr.mxu0 %v344
        %376 = vmatpush1.msra.mxu0 %v343
        %377 = vmatprep.subr.mxu0 %v346
        %378 = vmatpush1.msra.mxu0 %v345
        %379 = vmatprep.subr.mxu0 %v348
        %380 = vmatpush1.msra.mxu0 %v347
        %381 = vmatprep.subr.mxu0 %v350
        %382 = vmatpush1.msra.mxu0 %v349
        %383 = vmatprep.subr.mxu0 %v352
        %384 = vmatpush1.msra.mxu0 %v351
        %385 = vmatprep.subr.mxu0 0.0
        %386 = vmatpush1.msra.mxu0 0.0
        %387 = vmatprep.subr.mxu0 0.0
        %388 = vmatpush1.msra.mxu0 0.0
        %389 = vmatprep.subr.mxu0 0.0
        %390 = vmatpush1.msra.mxu0 0.0
        %391 = vmatprep.subr.mxu0 0.0
        %392 = vmatpush1.msra.mxu0 0.0
        %393 = vmatprep.subr.mxu0 0.0
        %394 = vmatpush1.msra.mxu0 0.0
        %395 = vmatprep.subr.mxu0 0.0
        %396 = vmatpush1.msra.mxu0 0.0
        %397 = vmatprep.subr.mxu0 0.0
        %398 = vmatpush1.msra.mxu0 0.0
        %399 = vmatprep.subr.mxu0 0.0
        %400 = vmatpush1.msra.mxu0 0.0
        %401 = vmatprep.subr.mxu0 0.0
        %402 = vmatpush1.msra.mxu0 0.0
        %403 = vmatprep.subr.mxu0 0.0
        %404 = vmatpush1.msra.mxu0 0.0
        %405 = vmatprep.subr.mxu0 0.0
        %406 = vmatpush1.msra.mxu0 0.0
        %407 = vmatprep.subr.mxu0 0.0
        %408 = vmatpush1.msra.mxu0 0.0
        %409 = vmatprep.subr.mxu0 0.0
        %410 = vmatpush1.msra.mxu0 0.0
        %411 = vmatprep.subr.mxu0 0.0
        %412 = vmatpush1.msra.mxu0 0.0
        %413 = vmatprep.subr.mxu0 0.0
        %414 = vmatpush1.msra.mxu0 0.0
        %415 = vmatprep.subr.mxu0 0.0
        %416 = vmatpush1.msra.mxu0 0.0
        %417 = vmatprep.mubr.f32.mxu0 0.0
        %418 = vmatmul.mubr.f32.gmra.mrb[0].mxu0 %v289
        %v419 = vpop.f32.mrb[0].mxu0
        %v420 = vadd.f32 0.0, %v419
        %v421 = vpop.f32.mrb[0].mxu0
        %v422 = vadd.f32 0.0, %v421
        %423 = vmatprep.mubr.f32.mxu0 0.0
        %424 = vmatmul.mubr.f32.gmra.mrb[0].mxu0 %v290
        %v425 = vpop.f32.mrb[0].mxu0
        %v426 = vadd.f32 0.0, %v425
        %v427 = vpop.f32.mrb[0].mxu0
        %v428 = vadd.f32 0.0, %v427
        %429 = vmatprep.mubr.f32.mxu0 0.0
        %430 = vmatmul.mubr.f32.gmra.mrb[0].mxu0 %v291
        %v431 = vpop.f32.mrb[0].mxu0
        %v432 = vadd.f32 0.0, %v431
        %v433 = vpop.f32.mrb[0].mxu0
        %v434 = vadd.f32 0.0, %v433
        %435 = vmatprep.mubr.f32.mxu0 0.0
        %436 = vmatmul.mubr.f32.gmra.mrb[0].mxu0 %v292
        %v437 = vpop.f32.mrb[0].mxu0
        %v438 = vadd.f32 0.0, %v437
        %v439 = vpop.f32.mrb[0].mxu0
        %v440 = vadd.f32 0.0, %v439
        %441 = vmatprep.mubr.f32.mxu0 0.0
        %442 = vmatmul.mubr.f32.gmra.mrb[0].mxu0 %v293
        %v443 = vpop.f32.mrb[0].mxu0
        %v444 = vadd.f32 0.0, %v443
        %v445 = vpop.f32.mrb[0].mxu0
        %v446 = vadd.f32 0.0, %v445
        %447 = vmatprep.mubr.f32.mxu0 0.0
        %448 = vmatmul.mubr.f32.gmra.mrb[0].mxu0 %v294
        %v449 = vpop.f32.mrb[0].mxu0
        %v450 = vadd.f32 0.0, %v449
        %v451 = vpop.f32.mrb[0].mxu0
        %v452 = vadd.f32 0.0, %v451
        %453 = vmatprep.mubr.f32.mxu0 0.0
        %454 = vmatmul.mubr.f32.gmra.mrb[0].mxu0 %v295
        %v455 = vpop.f32.mrb[0].mxu0
        %v456 = vadd.f32 0.0, %v455
        %v457 = vpop.f32.mrb[0].mxu0
        %v458 = vadd.f32 0.0, %v457
        %459 = vmatprep.mubr.f32.mxu0 0.0
        %460 = vmatmul.mubr.f32.gmra.mrb[0].mxu0 %v296
        %v461 = vpop.f32.mrb[0].mxu0
        %v462 = vadd.f32 0.0, %v461
        %v463 = vpop.f32.mrb[0].mxu0
        %v464 = vadd.f32 0.0, %v463
        %465 = vmatprep.mubr.f32.mxu0 0.0
        %466 = vmatmul.mubr.f32.gmra.mrb[0].mxu0 %v297
        %v467 = vpop.f32.mrb[0].mxu0
        %v468 = vadd.f32 0.0, %v467
        %v469 = vpop.f32.mrb[0].mxu0
        %v470 = vadd.f32 0.0, %v469
        %471 = vmatprep.mubr.f32.mxu0 0.0
        %472 = vmatmul.mubr.f32.gmra.mrb[0].mxu0 %v298
        %v473 = vpop.f32.mrb[0].mxu0
        %v474 = vadd.f32 0.0, %v473
        %v475 = vpop.f32.mrb[0].mxu0
        %v476 = vadd.f32 0.0, %v475
        %477 = vmatprep.mubr.f32.mxu0 0.0
        %478 = vmatmul.mubr.f32.gmra.mrb[0].mxu0 %v299
        %v479 = vpop.f32.mrb[0].mxu0
        %v480 = vadd.f32 0.0, %v479
        %v481 = vpop.f32.mrb[0].mxu0
        %v482 = vadd.f32 0.0, %v481
        %483 = vmatprep.mubr.f32.mxu0 0.0
        %484 = vmatmul.mubr.f32.gmra.mrb[0].mxu0 %v300
        %v485 = vpop.f32.mrb[0].mxu0
        %v486 = vadd.f32 0.0, %v485
        %v487 = vpop.f32.mrb[0].mxu0
        %v488 = vadd.f32 0.0, %v487
        %489 = vmatprep.mubr.f32.mxu0 0.0
        %490 = vmatmul.mubr.f32.gmra.mrb[0].mxu0 %v301
        %v491 = vpop.f32.mrb[0].mxu0
        %v492 = vadd.f32 0.0, %v491
        %v493 = vpop.f32.mrb[0].mxu0
        %v494 = vadd.f32 0.0, %v493
        %495 = vmatprep.mubr.f32.mxu0 0.0
        %496 = vmatmul.mubr.f32.gmra.mrb[0].mxu0 %v302
        %v497 = vpop.f32.mrb[0].mxu0
        %v498 = vadd.f32 0.0, %v497
        %v499 = vpop.f32.mrb[0].mxu0
        %v500 = vadd.f32 0.0, %v499
        %501 = vmatprep.mubr.f32.mxu0 0.0
        %502 = vmatmul.mubr.f32.gmra.mrb[0].mxu0 %v303
        %v503 = vpop.f32.mrb[0].mxu0
        %v504 = vadd.f32 0.0, %v503
        %v505 = vpop.f32.mrb[0].mxu0
        %v506 = vadd.f32 0.0, %v505
        %507 = vmatprep.mubr.f32.mxu0 0.0
        %508 = vmatmul.mubr.f32.gmra.mrb[0].mxu0 %v304
        %v509 = vpop.f32.mrb[0].mxu0
        %v510 = vadd.f32 0.0, %v509
        %v511 = vpop.f32.mrb[0].mxu0
        %v512 = vadd.f32 0.0, %v511
        %513 = vmatprep.mubr.f32.mxu0 0.0
        %514 = vmatmul.mubr.f32.gmra.mrb[0].mxu0 %v305
        %v515 = vpop.f32.mrb[0].mxu0
        %v516 = vadd.f32 0.0, %v515
        %v517 = vpop.f32.mrb[0].mxu0
        %v518 = vadd.f32 0.0, %v517
        %519 = vmatprep.mubr.f32.mxu0 0.0
        %520 = vmatmul.mubr.f32.gmra.mrb[0].mxu0 %v306
        %v521 = vpop.f32.mrb[0].mxu0
        %v522 = vadd.f32 0.0, %v521
        %v523 = vpop.f32.mrb[0].mxu0
        %v524 = vadd.f32 0.0, %v523
        %525 = vmatprep.mubr.f32.mxu0 0.0
        %526 = vmatmul.mubr.f32.gmra.mrb[0].mxu0 %v307
        %v527 = vpop.f32.mrb[0].mxu0
        %v528 = vadd.f32 0.0, %v527
        %v529 = vpop.f32.mrb[0].mxu0
        %v530 = vadd.f32 0.0, %v529
        %531 = vmatprep.mubr.f32.mxu0 0.0
        %532 = vmatmul.mubr.f32.gmra.mrb[0].mxu0 %v308
        %v533 = vpop.f32.mrb[0].mxu0
        %v534 = vadd.f32 0.0, %v533
        %v535 = vpop.f32.mrb[0].mxu0
        %v536 = vadd.f32 0.0, %v535
        %537 = vmatprep.mubr.f32.mxu0 0.0
        %538 = vmatmul.mubr.f32.gmra.mrb[0].mxu0 %v309
        %v539 = vpop.f32.mrb[0].mxu0
        %v540 = vadd.f32 0.0, %v539
        %v541 = vpop.f32.mrb[0].mxu0
        %v542 = vadd.f32 0.0, %v541
        %543 = vmatprep.mubr.f32.mxu0 0.0
        %544 = vmatmul.mubr.f32.gmra.mrb[0].mxu0 %v310
        %v545 = vpop.f32.mrb[0].mxu0
        %v546 = vadd.f32 0.0, %v545
        %v547 = vpop.f32.mrb[0].mxu0
        %v548 = vadd.f32 0.0, %v547
        %549 = vmatprep.mubr.f32.mxu0 0.0
        %550 = vmatmul.mubr.f32.gmra.mrb[0].mxu0 %v311
        %v551 = vpop.f32.mrb[0].mxu0
        %v552 = vadd.f32 0.0, %v551
        %v553 = vpop.f32.mrb[0].mxu0
        %v554 = vadd.f32 0.0, %v553
        %555 = vmatprep.mubr.f32.mxu0 0.0
        %556 = vmatmul.mubr.f32.gmra.mrb[0].mxu0 %v312
        %v557 = vpop.f32.mrb[0].mxu0
        %v558 = vadd.f32 0.0, %v557
        %v559 = vpop.f32.mrb[0].mxu0
        %v560 = vadd.f32 0.0, %v559
        %561 = vmatprep.mubr.f32.mxu0 0.0
        %562 = vmatmul.mubr.f32.gmra.mrb[0].mxu0 %v313
        %v563 = vpop.f32.mrb[0].mxu0
        %v564 = vadd.f32 0.0, %v563
        %v565 = vpop.f32.mrb[0].mxu0
        %v566 = vadd.f32 0.0, %v565
        %567 = vmatprep.mubr.f32.mxu0 0.0
        %568 = vmatmul.mubr.f32.gmra.mrb[0].mxu0 %v314
        %v569 = vpop.f32.mrb[0].mxu0
        %v570 = vadd.f32 0.0, %v569
        %v571 = vpop.f32.mrb[0].mxu0
        %v572 = vadd.f32 0.0, %v571
        %573 = vmatprep.mubr.f32.mxu0 0.0
        %574 = vmatmul.mubr.f32.gmra.mrb[0].mxu0 %v315
        %v575 = vpop.f32.mrb[0].mxu0
        %v576 = vadd.f32 0.0, %v575
        %v577 = vpop.f32.mrb[0].mxu0
        %v578 = vadd.f32 0.0, %v577
        %579 = vmatprep.mubr.f32.mxu0 0.0
        %580 = vmatmul.mubr.f32.gmra.mrb[0].mxu0 %v316
        %v581 = vpop.f32.mrb[0].mxu0
        %v582 = vadd.f32 0.0, %v581
        %v583 = vpop.f32.mrb[0].mxu0
        %v584 = vadd.f32 0.0, %v583
        %585 = vmatprep.mubr.f32.mxu0 0.0
        %586 = vmatmul.mubr.f32.gmra.mrb[0].mxu0 %v317
        %v587 = vpop.f32.mrb[0].mxu0
        %v588 = vadd.f32 0.0, %v587
        %v589 = vpop.f32.mrb[0].mxu0
        %v590 = vadd.f32 0.0, %v589
        %591 = vmatprep.mubr.f32.mxu0 0.0
        %592 = vmatmul.mubr.f32.gmra.mrb[0].mxu0 %v318
        %v593 = vpop.f32.mrb[0].mxu0
        %v594 = vadd.f32 0.0, %v593
        %v595 = vpop.f32.mrb[0].mxu0
        %v596 = vadd.f32 0.0, %v595
        %597 = vmatprep.mubr.f32.mxu0 0.0
        %598 = vmatmul.mubr.f32.gmra.mrb[0].mxu0 %v319
        %v599 = vpop.f32.mrb[0].mxu0
        %v600 = vadd.f32 0.0, %v599
        %v601 = vpop.f32.mrb[0].mxu0
        %v602 = vadd.f32 0.0, %v601
        %603 = vmatprep.mubr.f32.mxu0 0.0
        %604 = vmatmul.mubr.f32.gmra.mrb[0].mxu0 %v320
        %v605 = vpop.f32.mrb[0].mxu0
        %v606 = vadd.f32 0.0, %v605
        %v607 = vpop.f32.mrb[0].mxu0
        %v608 = vadd.f32 0.0, %v607
        %609 = vdwg.mxu0
        %610 = vst [vmem:[%s264] sm:$0xff] %v420
        %611 = vst [vmem:[%s264 + $0x8] sm:$0xff] %v426
        %612 = vst [vmem:[%s264 + $0x10] sm:$0xff] %v432
        %613 = vst [vmem:[%s264 + $0x18] sm:$0xff] %v438
        %614 = vst [vmem:[%s264 + $0x20] sm:$0xff] %v444
        %615 = vst [vmem:[%s264 + $0x28] sm:$0xff] %v450
        %616 = vst [vmem:[%s264 + $0x30] sm:$0xff] %v456
        %617 = vst [vmem:[%s264 + $0x38] sm:$0xff] %v462
        %618 = vst [vmem:[%s264 + $0x40] sm:$0xff] %v468
        %619 = vst [vmem:[%s264 + $0x48] sm:$0xff] %v474
        %620 = vst [vmem:[%s264 + $0x50] sm:$0xff] %v480
        %621 = vst [vmem:[%s264 + $0x58] sm:$0xff] %v486
        %622 = vst [vmem:[%s264 + $0x60] sm:$0xff] %v492
        %623 = vst [vmem:[%s264 + $0x68] sm:$0xff] %v498
        %624 = vst [vmem:[%s264 + $0x70] sm:$0xff] %v504
        %625 = vst [vmem:[%s264 + $0x78] sm:$0xff] %v510
        %626 = vst [vmem:[%s264 + $0x80] sm:$0xff] %v516
        %627 = vst [vmem:[%s264 + $0x88] sm:$0xff] %v522
        %628 = vst [vmem:[%s264 + $0x90] sm:$0xff] %v528
        %629 = vst [vmem:[%s264 + $0x98] sm:$0xff] %v534
        %630 = vst [vmem:[%s264 + $0xa0] sm:$0xff] %v540
        %631 = vst [vmem:[%s264 + $0xa8] sm:$0xff] %v546
        %632 = vst [vmem:[%s264 + $0xb0] sm:$0xff] %v552
        %633 = vst [vmem:[%s264 + $0xb8] sm:$0xff] %v558
        %634 = vst [vmem:[%s264 + $0xc0] sm:$0xff] %v564
        %635 = vst [vmem:[%s264 + $0xc8] sm:$0xff] %v570
        %636 = vst [vmem:[%s264 + $0xd0] sm:$0xff] %v576
        %637 = vst [vmem:[%s264 + $0xd8] sm:$0xff] %v582
        %638 = vst [vmem:[%s264 + $0xe0] sm:$0xff] %v588
        %639 = vst [vmem:[%s264 + $0xe8] sm:$0xff] %v594
        %640 = vst [vmem:[%s264 + $0xf0] sm:$0xff] %v600
        %641 = vst [vmem:[%s264 + $0xf8] sm:$0xff] %v606
        %642 = vst [vmem:[%s271] sm:$0xff] %v422
        %643 = vst [vmem:[%s271 + $0x8] sm:$0xff] %v428
        %644 = vst [vmem:[%s271 + $0x10] sm:$0xff] %v434
        %645 = vst [vmem:[%s271 + $0x18] sm:$0xff] %v440
        %646 = vst [vmem:[%s271 + $0x20] sm:$0xff] %v446
        %647 = vst [vmem:[%s271 + $0x28] sm:$0xff] %v452
        %648 = vst [vmem:[%s271 + $0x30] sm:$0xff] %v458
        %649 = vst [vmem:[%s271 + $0x38] sm:$0xff] %v464
        %650 = vst [vmem:[%s271 + $0x40] sm:$0xff] %v470
        %651 = vst [vmem:[%s271 + $0x48] sm:$0xff] %v476
        %652 = vst [vmem:[%s271 + $0x50] sm:$0xff] %v482
        %653 = vst [vmem:[%s271 + $0x58] sm:$0xff] %v488
        %654 = vst [vmem:[%s271 + $0x60] sm:$0xff] %v494
        %655 = vst [vmem:[%s271 + $0x68] sm:$0xff] %v500
        %656 = vst [vmem:[%s271 + $0x70] sm:$0xff] %v506
        %657 = vst [vmem:[%s271 + $0x78] sm:$0xff] %v512
        %658 = vst [vmem:[%s271 + $0x80] sm:$0xff] %v518
        %659 = vst [vmem:[%s271 + $0x88] sm:$0xff] %v524
        %660 = vst [vmem:[%s271 + $0x90] sm:$0xff] %v530
        %661 = vst [vmem:[%s271 + $0x98] sm:$0xff] %v536
        %662 = vst [vmem:[%s271 + $0xa0] sm:$0xff] %v542
        %663 = vst [vmem:[%s271 + $0xa8] sm:$0xff] %v548
        %664 = vst [vmem:[%s271 + $0xb0] sm:$0xff] %v554
        %665 = vst [vmem:[%s271 + $0xb8] sm:$0xff] %v560
        %666 = vst [vmem:[%s271 + $0xc0] sm:$0xff] %v566
        %667 = vst [vmem:[%s271 + $0xc8] sm:$0xff] %v572
        %668 = vst [vmem:[%s271 + $0xd0] sm:$0xff] %v578
        %669 = vst [vmem:[%s271 + $0xd8] sm:$0xff] %v584
        %670 = vst [vmem:[%s271 + $0xe0] sm:$0xff] %v590
        %671 = vst [vmem:[%s271 + $0xe8] sm:$0xff] %v596
        %672 = vst [vmem:[%s271 + $0xf0] sm:$0xff] %v602
        %673 = vst [vmem:[%s271 + $0xf8] sm:$0xff] %v608
        %v674 = vadd.f32 %v420, %v426
        %v675 = vadd.f32 %v674, %v432
        %v676 = vadd.f32 %v675, %v438
        %v677 = vadd.f32 %v676, %v444
        %v678 = vadd.f32 %v677, %v450
        %v679 = vadd.f32 %v678, %v456
        %v680 = vadd.f32 %v679, %v462
        %v681 = vadd.f32 %v680, %v468
        %v682 = vadd.f32 %v681, %v474
        %v683 = vadd.f32 %v682, %v480
        %v684 = vadd.f32 %v683, %v486
        %v685 = vadd.f32 %v684, %v492
        %v686 = vadd.f32 %v685, %v498
        %v687 = vadd.f32 %v686, %v504
        %v688 = vadd.f32 %v687, %v510
        %v689 = vadd.f32 %v688, %v516
        %v690 = vadd.f32 %v689, %v522
        %v691 = vadd.f32 %v690, %v528
        %v692 = vadd.f32 %v691, %v534
        %v693 = vadd.f32 %v692, %v540
        %v694 = vadd.f32 %v693, %v546
        %v695 = vadd.f32 %v694, %v552
        %v696 = vadd.f32 %v695, %v558
        %v697 = vadd.f32 %v696, %v564
        %v698 = vadd.f32 %v697, %v570
        %v699 = vadd.f32 %v698, %v576
        %v700 = vadd.f32 %v699, %v582
        %v701 = vadd.f32 %v700, %v588
        %v702 = vadd.f32 %v701, %v594
        %v703 = vadd.f32 %v702, %v600
        %v704 = vadd.f32 %v703, %v606
        %v705 = vrot.slane %v704, 4
        %v706 = vadd.f32 %v704, %v705
        %v707 = vrot.slane %v706, 2
        %v708 = vadd.f32 %v706, %v707
        %v709 = vrot.slane %v708, 1
        %v710 = vadd.f32 %v708, %v709
        %v711 = vmul.f32 %v420, %v420
        %v712 = vmul.f32 %v426, %v426
        %v713 = vmul.f32 %v432, %v432
        %v714 = vmul.f32 %v438, %v438
        %v715 = vmul.f32 %v444, %v444
        %v716 = vmul.f32 %v450, %v450
        %v717 = vmul.f32 %v456, %v456
        %v718 = vmul.f32 %v462, %v462
        %v719 = vmul.f32 %v468, %v468
        %v720 = vmul.f32 %v474, %v474
        %v721 = vmul.f32 %v480, %v480
        %v722 = vmul.f32 %v486, %v486
        %v723 = vmul.f32 %v492, %v492
        %v724 = vmul.f32 %v498, %v498
        %v725 = vmul.f32 %v504, %v504
        %v726 = vmul.f32 %v510, %v510
        %v727 = vmul.f32 %v516, %v516
        %v728 = vmul.f32 %v522, %v522
        %v729 = vmul.f32 %v528, %v528
        %v730 = vmul.f32 %v534, %v534
        %v731 = vmul.f32 %v540, %v540
        %v732 = vmul.f32 %v546, %v546
        %v733 = vmul.f32 %v552, %v552
        %v734 = vmul.f32 %v558, %v558
        %v735 = vmul.f32 %v564, %v564
        %v736 = vmul.f32 %v570, %v570
        %v737 = vmul.f32 %v576, %v576
        %v738 = vmul.f32 %v582, %v582
        %v739 = vmul.f32 %v588, %v588
        %v740 = vmul.f32 %v594, %v594
        %v741 = vmul.f32 %v600, %v600
        %v742 = vmul.f32 %v606, %v606
        %v743 = vadd.f32 %v711, %v712
        %v744 = vadd.f32 %v743, %v713
        %v745 = vadd.f32 %v744, %v714
        %v746 = vadd.f32 %v745, %v715
        %v747 = vadd.f32 %v746, %v716
        %v748 = vadd.f32 %v747, %v717
        %v749 = vadd.f32 %v748, %v718
        %v750 = vadd.f32 %v749, %v719
        %v751 = vadd.f32 %v750, %v720
        %v752 = vadd.f32 %v751, %v721
        %v753 = vadd.f32 %v752, %v722
        %v754 = vadd.f32 %v753, %v723
        %v755 = vadd.f32 %v754, %v724
        %v756 = vadd.f32 %v755, %v725
        %v757 = vadd.f32 %v756, %v726
        %v758 = vadd.f32 %v757, %v727
        %v759 = vadd.f32 %v758, %v728
        %v760 = vadd.f32 %v759, %v729
        %v761 = vadd.f32 %v760, %v730
        %v762 = vadd.f32 %v761, %v731
        %v763 = vadd.f32 %v762, %v732
        %v764 = vadd.f32 %v763, %v733
        %v765 = vadd.f32 %v764, %v734
        %v766 = vadd.f32 %v765, %v735
        %v767 = vadd.f32 %v766, %v736
        %v768 = vadd.f32 %v767, %v737
        %v769 = vadd.f32 %v768, %v738
        %v770 = vadd.f32 %v769, %v739
        %v771 = vadd.f32 %v770, %v740
        %v772 = vadd.f32 %v771, %v741
        %v773 = vadd.f32 %v772, %v742
        %v774 = vrot.slane %v773, 4
        %v775 = vadd.f32 %v773, %v774
        %v776 = vrot.slane %v775, 2
        %v777 = vadd.f32 %v775, %v776
        %v778 = vrot.slane %v777, 1
        %v779 = vadd.f32 %v777, %v778
        %vm780 = vcmask 1040384
        %v781 = vsel %vm780, %v710, %v779
        %782 = vst [vmem:[%s278] sm:$0x3] %v781
        %v783 = vadd.f32 %v422, %v428
        %v784 = vadd.f32 %v783, %v434
        %v785 = vadd.f32 %v784, %v440
        %v786 = vadd.f32 %v785, %v446
        %v787 = vadd.f32 %v786, %v452
        %v788 = vadd.f32 %v787, %v458
        %v789 = vadd.f32 %v788, %v464
        %v790 = vadd.f32 %v789, %v470
        %v791 = vadd.f32 %v790, %v476
        %v792 = vadd.f32 %v791, %v482
        %v793 = vadd.f32 %v792, %v488
        %v794 = vadd.f32 %v793, %v494
        %v795 = vadd.f32 %v794, %v500
        %v796 = vadd.f32 %v795, %v506
        %v797 = vadd.f32 %v796, %v512
        %v798 = vadd.f32 %v797, %v518
        %v799 = vadd.f32 %v798, %v524
        %v800 = vadd.f32 %v799, %v530
        %v801 = vadd.f32 %v800, %v536
        %v802 = vadd.f32 %v801, %v542
        %v803 = vadd.f32 %v802, %v548
        %v804 = vadd.f32 %v803, %v554
        %v805 = vadd.f32 %v804, %v560
        %v806 = vadd.f32 %v805, %v566
        %v807 = vadd.f32 %v806, %v572
        %v808 = vadd.f32 %v807, %v578
        %v809 = vadd.f32 %v808, %v584
        %v810 = vadd.f32 %v809, %v590
        %v811 = vadd.f32 %v810, %v596
        %v812 = vadd.f32 %v811, %v602
        %v813 = vadd.f32 %v812, %v608
        %v814 = vrot.slane %v813, 4
        %v815 = vadd.f32 %v813, %v814
        %v816 = vrot.slane %v815, 2
        %v817 = vadd.f32 %v815, %v816
        %v818 = vrot.slane %v817, 1
        %v819 = vadd.f32 %v817, %v818
        %v820 = vmul.f32 %v422, %v422
        %v821 = vmul.f32 %v428, %v428
        %v822 = vmul.f32 %v434, %v434
        %v823 = vmul.f32 %v440, %v440
        %v824 = vmul.f32 %v446, %v446
        %v825 = vmul.f32 %v452, %v452
        %v826 = vmul.f32 %v458, %v458
        %v827 = vmul.f32 %v464, %v464
        %v828 = vmul.f32 %v470, %v470
        %v829 = vmul.f32 %v476, %v476
        %v830 = vmul.f32 %v482, %v482
        %v831 = vmul.f32 %v488, %v488
        %v832 = vmul.f32 %v494, %v494
        %v833 = vmul.f32 %v500, %v500
        %v834 = vmul.f32 %v506, %v506
        %v835 = vmul.f32 %v512, %v512
        %v836 = vmul.f32 %v518, %v518
        %v837 = vmul.f32 %v524, %v524
        %v838 = vmul.f32 %v530, %v530
        %v839 = vmul.f32 %v536, %v536
        %v840 = vmul.f32 %v542, %v542
        %v841 = vmul.f32 %v548, %v548
        %v842 = vmul.f32 %v554, %v554
        %v843 = vmul.f32 %v560, %v560
        %v844 = vmul.f32 %v566, %v566
        %v845 = vmul.f32 %v572, %v572
        %v846 = vmul.f32 %v578, %v578
        %v847 = vmul.f32 %v584, %v584
        %v848 = vmul.f32 %v590, %v590
        %v849 = vmul.f32 %v596, %v596
        %v850 = vmul.f32 %v602, %v602
        %v851 = vmul.f32 %v608, %v608
        %v852 = vadd.f32 %v820, %v821
        %v853 = vadd.f32 %v852, %v822
        %v854 = vadd.f32 %v853, %v823
        %v855 = vadd.f32 %v854, %v824
        %v856 = vadd.f32 %v855, %v825
        %v857 = vadd.f32 %v856, %v826
        %v858 = vadd.f32 %v857, %v827
        %v859 = vadd.f32 %v858, %v828
        %v860 = vadd.f32 %v859, %v829
        %v861 = vadd.f32 %v860, %v830
        %v862 = vadd.f32 %v861, %v831
        %v863 = vadd.f32 %v862, %v832
        %v864 = vadd.f32 %v863, %v833
        %v865 = vadd.f32 %v864, %v834
        %v866 = vadd.f32 %v865, %v835
        %v867 = vadd.f32 %v866, %v836
        %v868 = vadd.f32 %v867, %v837
        %v869 = vadd.f32 %v868, %v838
        %v870 = vadd.f32 %v869, %v839
        %v871 = vadd.f32 %v870, %v840
        %v872 = vadd.f32 %v871, %v841
        %v873 = vadd.f32 %v872, %v842
        %v874 = vadd.f32 %v873, %v843
        %v875 = vadd.f32 %v874, %v844
        %v876 = vadd.f32 %v875, %v845
        %v877 = vadd.f32 %v876, %v846
        %v878 = vadd.f32 %v877, %v847
        %v879 = vadd.f32 %v878, %v848
        %v880 = vadd.f32 %v879, %v849
        %v881 = vadd.f32 %v880, %v850
        %v882 = vadd.f32 %v881, %v851
        %v883 = vrot.slane %v882, 4
        %v884 = vadd.f32 %v882, %v883
        %v885 = vrot.slane %v884, 2
        %v886 = vadd.f32 %v884, %v885
        %v887 = vrot.slane %v886, 1
        %v888 = vadd.f32 %v886, %v887
        %v889 = vsel %vm780, %v819, %v888
        %890 = vst [vmem:[%s285] sm:$0x3] %v889
        %s891 = sand.u32 %s85, 1
        %s892 = scalar_lea.sflag [#allocation4], %s891
        %s893 = sand.u32 %s85, 1
        %s894 = smul.addr %s893, 256
        %s895 = scalar_lea.vmem [#allocation7], %s894
        %s896 = sand.u32 %s30, 1
        %s897 = scalar_lea.sflag [#allocation9], %s896
        %s898 = sand.u32 %s111, 1
        %s899 = smul.addr %s898, 256
        %s900 = scalar_lea.vmem [#allocation8], %s899
        %s901 = sand.u32 %s30, 1
        %s902 = scalar_lea.sflag [#allocation9], %s901
        %s903 = sand.u32 %s137, 1
        %s904 = smul.addr %s903, 2
        %s905 = scalar_lea.vmem [#allocation10], %s904
        %s906 = sand.u32 %s163, 1
        %s907 = scalar_lea.sflag [#allocation12], %s906
        %s908 = sand.u32 %s163, 1
        %s909 = smul.addr %s908, 2
        %s910 = scalar_lea.vmem [#allocation11], %s909
        // Predicated region
        $region37: #{tpu_custom_call.1} parent=27 // pred_check
          %p911 = pneg %p95
        $region38: #{tpu_custom_call.1} parent=27 // pred_check_branch
          %913 = sbr.rel (%p911) target = $region40
        $region39: #{tpu_custom_call.1} parent=27 // pred_region
          %s914 = smul.u32 32, %s30
          %s916 = ssub.s32 4096, 4096
          %917 = vsyncadd %s892, %s916
          %s918 = smul.addr %s914, 128
          %s919 = scalar_lea.hbm %s2, %s918
          %s920 = sshll.u32 %s895, 4
          %s921 = int_to_ptr.vmem [resolvable:$true] %s920
          %926 = dma.vmem_to_hbm [thread:$0]  %s921, 4096, %s919, %s892, 128, 128, 8
        $region40: #{tpu_custom_call.1} parent=27 // pred_fallthru
          _
        // Predicated region
        $region41: #{tpu_custom_call.1} parent=27 // pred_check
          %p927 = pneg %p121
        $region42: #{tpu_custom_call.1} parent=27 // pred_check_branch
          %929 = sbr.rel (%p927) target = $region44
        $region43: #{tpu_custom_call.1} parent=27 // pred_region
          %s930 = smul.u32 32, %s30
          %s932 = ssub.s32 4096, 4096
          %933 = vsyncadd %s897, %s932
          %s934 = smul.addr %s930, 128
          %s935 = scalar_lea.hbm %s3, %s934
          %s936 = sshll.u32 %s900, 4
          %s937 = int_to_ptr.vmem [resolvable:$true] %s936
          %942 = dma.vmem_to_hbm [thread:$0]  %s937, 4096, %s935, %s897, 128, 128, 8
        $region44: #{tpu_custom_call.1} parent=27 // pred_fallthru
          _
        // Predicated region
        $region45: #{tpu_custom_call.1} parent=27 // pred_check
          %p943 = pneg %p147
        $region46: #{tpu_custom_call.1} parent=27 // pred_check_branch
          %945 = sbr.rel (%p943) target = $region48
        $region47: #{tpu_custom_call.1} parent=27 // pred_region
          %s947 = ssub.s32 32, 32
          %948 = vsyncadd %s902, %s947
          %s949 = smul.addr %s30, 32
          %s950 = scalar_lea.hbm %s4, %s949
          %s952 = sshll.u32 %s905, 4
          %s953 = int_to_ptr.vmem [resolvable:$true] %s952
          %955 = dma.vmem_to_hbm [thread:$0]  %s953, 32, %s950, %s902
        $region48: #{tpu_custom_call.1} parent=27 // pred_fallthru
          _
        // Predicated region
        $region49: #{tpu_custom_call.1} parent=27 // pred_check
          %p956 = pneg %p173
        $region50: #{tpu_custom_call.1} parent=27 // pred_check_branch
          %958 = sbr.rel (%p956) target = $region52
        $region51: #{tpu_custom_call.1} parent=27 // pred_region
          %s960 = ssub.s32 32, 32
          %961 = vsyncadd %s907, %s960
          %s962 = smul.addr %s30, 32
          %s963 = scalar_lea.hbm %s5, %s962
          %s965 = sshll.u32 %s910, 4
          %s966 = int_to_ptr.vmem [resolvable:$true] %s965
          %968 = dma.vmem_to_hbm [thread:$0]  %s966, 32, %s963, %s907
        $region52: #{tpu_custom_call.1} parent=27 // pred_fallthru
          _
      $region28: #{tpu_custom_call.1} parent=5 // pred_fallthru
        _
      %p969 = scmp.le.s32.totalorder 2, %s25
      // Predicated region
      $region53: #{tpu_custom_call.1} parent=5 // pred_check
        %p970 = pneg %p969
      $region54: #{tpu_custom_call.1} parent=5 // pred_check_branch
        %972 = sbr.rel (%p970) target = $region56
      $region55: #{tpu_custom_call.1} parent=5 // pred_region
        %s973 = ssub.s32 %s25, 2
        // Predicated region
        $region57: #{tpu_custom_call.1} parent=55 // pred_check
          %p974 = pneg %p101
        $region58: #{tpu_custom_call.1} parent=55 // pred_check_branch
          %976 = sbr.rel (%p974) target = $region60
        $region59: #{tpu_custom_call.1} parent=55 // pred_region
          %s977 = sand.u32 %s86, 1
          %s978 = scalar_lea.sflag [#allocation4], %s977
          %s979 = sand.u32 %s86, 1
          %s980 = smul.addr %s979, 256
          %s981 = scalar_lea.vmem [#allocation7], %s980
          %982 = dma.done %s978, 4096
        $region60: #{tpu_custom_call.1} parent=55 // pred_fallthru
          _
        // Predicated region
        $region61: #{tpu_custom_call.1} parent=55 // pred_check
          %p983 = pneg %p127
        $region62: #{tpu_custom_call.1} parent=55 // pred_check_branch
          %985 = sbr.rel (%p983) target = $region64
        $region63: #{tpu_custom_call.1} parent=55 // pred_region
          %s986 = sand.u32 %s31, 1
          %s987 = scalar_lea.sflag [#allocation9], %s986
          %s988 = sand.u32 %s112, 1
          %s989 = smul.addr %s988, 256
          %s990 = scalar_lea.vmem [#allocation8], %s989
          %991 = dma.done %s987, 4096
        $region64: #{tpu_custom_call.1} parent=55 // pred_fallthru
          _
        // Predicated region
        $region65: #{tpu_custom_call.1} parent=55 // pred_check
          %p992 = pneg %p153
        $region66: #{tpu_custom_call.1} parent=55 // pred_check_branch
          %994 = sbr.rel (%p992) target = $region68
        $region67: #{tpu_custom_call.1} parent=55 // pred_region
          %s995 = sand.u32 %s31, 1
          %s996 = scalar_lea.sflag [#allocation9], %s995
          %s997 = sand.u32 %s138, 1
          %s998 = smul.addr %s997, 2
          %s999 = scalar_lea.vmem [#allocation10], %s998
          %1000 = dma.done %s996, 32
        $region68: #{tpu_custom_call.1} parent=55 // pred_fallthru
          _
        // Predicated region
        $region69: #{tpu_custom_call.1} parent=55 // pred_check
          %p1001 = pneg %p179
        $region70: #{tpu_custom_call.1} parent=55 // pred_check_branch
          %1003 = sbr.rel (%p1001) target = $region72
        $region71: #{tpu_custom_call.1} parent=55 // pred_region
          %s1004 = sand.u32 %s164, 1
          %s1005 = scalar_lea.sflag [#allocation12], %s1004
          %s1006 = sand.u32 %s164, 1
          %s1007 = smul.addr %s1006, 2
          %s1008 = scalar_lea.vmem [#allocation11], %s1007
          %1009 = dma.done %s1005, 32
        $region72: #{tpu_custom_call.1} parent=55 // pred_fallthru
          _
      $region56: #{tpu_custom_call.1} parent=5 // pred_fallthru
        _
    $region6: #{tpu_custom_call.1} parent=1 // loop_footer
      %s29 = sadd.s32 1, %s25
    $region7: #{tpu_custom_call.1} parent=1 // loop_footer_branch
      %24 = sbr.rel target = $region3
    $region8: #{tpu_custom_call.1} parent=1 // loop_exit
      _
    %1010 = vsyncpa [#allocation3], 1
    %s1011 = scalar_lea.sflag [#allocation3], 1
    %1012 = vsyncpa %s1011, 1
    %1013 = vsyncpa [#allocation6], 1
    %1014 = vsyncpa [#allocation4], 1
    %s1015 = scalar_lea.sflag [#allocation4], 1
    %1016 = vsyncpa %s1015, 1
    %1017 = vsyncpa [#allocation9], 1
    %s1018 = scalar_lea.sflag [#allocation9], 1
    %1019 = vsyncpa %s1018, 1
    %1020 = vsyncpa [#allocation12], 1
    %s1021 = scalar_lea.sflag [#allocation12], 1
    %1022 = vsyncpa %s1021, 1

</llo_original>
